<compile_context>
chip_gen: v5e
topology: v5e:2x2
jax: 0.10.0
libtpu: 0.0.40
codegen_flags: <defaults>
</compile_context>

<pallas_src>
import functools

import jax
import jax.numpy as jnp
from jax.experimental import pallas as pl
from jax.experimental.pallas import tpu as pltpu

KSIZE = 7
PAD = 3
_LANE = 128


def _round_up(v, m):
    return (v + m - 1) // m * m


def _num_tensorcores():
    """Best-effort TensorCore count per chip (2 on v7x, else 1)."""
    try:
        kind = jax.devices()[0].device_kind.lower()
    except Exception:
        return 1
    return 2 if "v7" in kind else 1


def _spatial_attn_kernel(ta_ref, tm_ref, x_ref, o_ref, sum_ref, max_ref):
    # ta/tm : (HW, TN)      column blocks of the avg/max Toeplitz conv weights.
    # x     : (BB, C, HW)   input batch block (constant across the column axis).
    # o     : (BB, TN)      sigmoid(conv) column block -- squeezed, lane-dense.
    # sum/max scratch: (BB, HW) f32 channel reductions, computed once per batch
    #                  block (n == 0) and reused for every column block.
    C = x_ref.shape[1]
    CC = 8  # channel chunk: bounds the f32 temporary to (BB, 8, HW)

    @pl.when(pl.program_id(1) == 0)
    def _():
        c1 = min(CC, C)
        x0 = x_ref[:, 0:c1, :]
        sum_ref[...] = jnp.sum(x0.astype(jnp.float32), axis=1)
        max_ref[...] = jnp.max(x0, axis=1).astype(jnp.float32)
        for c0 in range(c1, C, CC):           # static, sublane-aligned chunks
            ce = min(c0 + CC, C)
            xc = x_ref[:, c0:ce, :]
            sum_ref[...] = sum_ref[...] + jnp.sum(xc.astype(jnp.float32), axis=1)
            max_ref[...] = jnp.maximum(
                max_ref[...], jnp.max(xc, axis=1).astype(jnp.float32))

    lhs_dt = ta_ref.dtype  # f32 (exact) or bf16 (mxu_bf16 fast path)
    conv = (jnp.dot(sum_ref[...].astype(lhs_dt), ta_ref[...],
                    preferred_element_type=jnp.float32)
            + jnp.dot(max_ref[...].astype(lhs_dt), tm_ref[...],
                      preferred_element_type=jnp.float32))
    o_ref[...] = jax.nn.sigmoid(conv).astype(o_ref.dtype)


def _build_toeplitz(weight, C, H, W, hw_pad, dtype):
    """(1, 2, K, K) conv weight -> two (HW, hw_pad) Toeplitz matrices.

    T[i*W + j, h*W + w] = weight[0, c, i-h+P, j-w+P] when the tap is in range,
    else 0 (zero padding is implicit).  The avg half is pre-scaled by 1/C so
    the kernel can use a channel *sum* instead of a mean.  Columns >= H*W are
    zero padding of the output (lane alignment) and are sliced off later.
    """
    HW = H * W
    i = jnp.arange(H)[:, None, None, None]   # input row
    j = jnp.arange(W)[None, :, None, None]   # input col
    h = jnp.arange(H)[None, None, :, None]   # output row
    w = jnp.arange(W)[None, None, None, :]   # output col
    kh = i - h + PAD
    kw = j - w + PAD
    valid = (kh >= 0) & (kh < KSIZE) & (kw >= 0) & (kw < KSIZE)
    kh_c = jnp.clip(kh, 0, KSIZE - 1)
    kw_c = jnp.clip(kw, 0, KSIZE - 1)

    w_avg = weight[0, 0].astype(jnp.float32) / C          # fold the mean's 1/C
    w_max = weight[0, 1].astype(jnp.float32)
    t_avg = jnp.where(valid, w_avg[kh_c, kw_c], 0.0).reshape(HW, HW)
    t_max = jnp.where(valid, w_max[kh_c, kw_c], 0.0).reshape(HW, HW)
    if hw_pad > HW:
        pad = ((0, 0), (0, hw_pad - HW))
        t_avg = jnp.pad(t_avg, pad)
        t_max = jnp.pad(t_max, pad)
    return t_avg.astype(dtype), t_max.astype(dtype)


def _pick_block_b(B, C, HW, itemsize, num_cores, max_block_bytes=12 << 20):
    """Largest divisor of B whose input block fits in max_block_bytes; on
    2-core parts keep >= 2 batch blocks so both TensorCores get work."""
    if B <= 1:
        return 1
    row_bytes = _round_up(C, 8) * _round_up(HW, _LANE) * itemsize
    cap = max(1, max_block_bytes // max(1, row_bytes))
    if num_cores >= 2:
        cap = min(cap, max(1, B // 2))
    target = min(B, cap)
    for bb in range(target, 0, -1):
        if B % bb == 0:
            return bb
    return 1


def _pick_block_n(HW, hw_pad, t_itemsize, max_half_bytes=2 << 20):
    """Column-block width for the Toeplitz halves: a multiple of 128 dividing
    hw_pad, with each (HW, TN) half block <= max_half_bytes."""
    cap = max(_LANE, (max_half_bytes // max(1, HW * t_itemsize)) // _LANE * _LANE)
    tn = min(hw_pad, cap)
    while hw_pad % tn:
        tn -= _LANE
    return max(tn, _LANE)


@functools.partial(jax.jit, static_argnames=("block_b", "block_n", "mxu_bf16"))
def spatial_attention(x, weight, *, block_b=None, block_n=None, mxu_bf16=False):
    """CBAM SpatialAttention forward: sigmoid(conv7x7([mean_c(x), max_c(x)])).

    x: (B, C, H, W) float32 or bfloat16 (pass bf16 to halve HBM read traffic).
    weight: (1, 2, 7, 7) conv filter, no bias.  Returns (B, 1, H, W) in x.dtype.
    mxu_bf16=True uses bf16 Toeplitz weights / MXU operands (f32 accumulate).
    """
    B, C, H, W = x.shape
    assert weight.shape == (1, 2, KSIZE, KSIZE)
    HW = H * W
    hw_pad = _round_up(HW, _LANE)

    t_dtype = jnp.bfloat16 if mxu_bf16 else jnp.float32
    t_itemsize = jnp.dtype(t_dtype).itemsize
    x_itemsize = jnp.dtype(x.dtype).itemsize

    if block_b is None:
        block_b = _pick_block_b(B, C, HW, x_itemsize, _num_tensorcores())
    if block_n is None:
        block_n = _pick_block_n(HW, hw_pad, t_itemsize)
    assert B % block_b == 0 and hw_pad % block_n == 0

    t_avg, t_max = _build_toeplitz(weight, C, H, W, hw_pad, t_dtype)
    x_flat = x.reshape(B, C, HW)            # contiguous NCHW -> free reshape

    # Explicit VMEM budget: double-buffered x + 2 double-buffered T halves +
    # double-buffered out + f32 reduction scratch, plus headroom for Mosaic
    # internals.  Clamped to stay legal on v7x's 64 MiB physical VMEM.
    x_blk = block_b * _round_up(C, 8) * _round_up(HW, _LANE) * x_itemsize
    t_blk = _round_up(HW, 8) * block_n * t_itemsize
    o_blk = _round_up(block_b, 8) * block_n * x_itemsize
    scr = 2 * _round_up(block_b, 8) * hw_pad * 4
    need = 2 * x_blk + 2 * 2 * t_blk + 2 * o_blk + scr
    vmem_limit = int(min(60 << 20, max(32 << 20, need + (8 << 20))))

    grid_spec = pltpu.PrefetchScalarGridSpec(
        num_scalar_prefetch=0,
        grid=(B // block_b, hw_pad // block_n),    # columns (n) innermost
        in_specs=[
            pl.BlockSpec((HW, block_n), lambda b, n: (0, n)),   # t_avg columns
            pl.BlockSpec((HW, block_n), lambda b, n: (0, n)),   # t_max columns
            # x block index is constant in n -> DMA'd once per batch block.
            pl.BlockSpec((block_b, C, HW), lambda b, n: (b, 0, 0)),
        ],
        out_specs=pl.BlockSpec((block_b, block_n), lambda b, n: (b, n)),
        scratch_shapes=[
            pltpu.VMEM((block_b, HW), jnp.float32),   # channel sum (mean * C)
            pltpu.VMEM((block_b, HW), jnp.float32),   # channel max
        ],
    )

    out_flat = pl.pallas_call(
        _spatial_attn_kernel,
        out_shape=jax.ShapeDtypeStruct((B, hw_pad), x.dtype),
        grid_spec=grid_spec,
        compiler_params=pltpu.CompilerParams(
            dimension_semantics=("parallel", "arbitrary"),
            vmem_limit_bytes=vmem_limit),
    )(t_avg, t_max, x_flat)

    return out_flat[:, :HW].reshape(B, 1, H, W)


def _reference(x, weight):
    avg_out = jnp.mean(x, axis=1, keepdims=True)
    max_out = jnp.max(x, axis=1, keepdims=True)
    xc = jnp.concatenate([avg_out, max_out], axis=1)
    out = jax.lax.conv_general_dilated(
        xc, weight, window_strides=(1, 1),
        padding=((PAD, PAD), (PAD, PAD)),
        dimension_numbers=("NCHW", "OIHW", "NCHW"),
        precision=jax.lax.Precision.HIGHEST)
    return jax.nn.sigmoid(out)


if __name__ == "__main__":
    key = jax.random.PRNGKey(0)
    kx, kw = jax.random.split(key)

    B, C, H, W = 2, 4, 16, 16
    x = jax.random.normal(kx, (B, C, H, W), dtype=jnp.float32)
    # Deterministic synthetic conv weight (matches nn.Conv2d(2, 1, 7, bias=False)).
    weight = 0.1 * jax.random.normal(kw, (1, 2, KSIZE, KSIZE), dtype=jnp.float32)

    ref = _reference(x, weight)

    # Exact (f32) path.
    out = spatial_attention(x, weight)
    out = jax.block_until_ready(out)
    assert out.shape == (B, 1, H, W)
    assert jnp.allclose(out, ref, atol=1e-5, rtol=1e-5), "f32 mismatch vs reference"

    # bf16 fast path (bf16 activations + bf16 MXU operands, f32 accumulation).
    out_bf16 = spatial_attention(x.astype(jnp.bfloat16), weight, mxu_bf16=True)
    out_bf16 = jax.block_until_ready(out_bf16)
    assert out_bf16.shape == (B, 1, H, W)
    assert jnp.allclose(out_bf16.astype(jnp.float32), ref, atol=2e-2, rtol=2e-2), \
        "bf16 mismatch vs reference"

    print("KERNEL_OK")
</pallas_src>

<mosaic_0001>
module attributes {stable_mosaic.version = 11 : i64} {
  func.func @_spatial_attn_kernel(%arg0: i32, %arg1: i32, %arg2: memref<256x256xf32, #tpu.memory_space<vmem>>, %arg3: memref<256x256xf32, #tpu.memory_space<vmem>>, %arg4: memref<2x4x256xf32, #tpu.memory_space<vmem>>, %arg5: memref<2x256xf32, #tpu.memory_space<vmem>>, %arg6: memref<2x256xf32, #tpu.memory_space<vmem>>, %arg7: memref<2x256xf32, #tpu.memory_space<vmem>>) attributes {dimension_semantics = [#tpu.dimension_semantics<parallel>, #tpu.dimension_semantics<arbitrary>], iteration_bounds = array<i64: 1, 1>, scalar_prefetch = 0 : i64, scratch_operands = 2 : i64, tpu.core_type = #tpu.core_type<tc>, window_params = [{transform_indices = @transform_0, window_bounds = array<i64: 256, 256>}, {transform_indices = @transform_1, window_bounds = array<i64: 256, 256>}, {transform_indices = @transform_2, window_bounds = array<i64: 2, 4, 256>}, {transform_indices = @transform_3, window_bounds = array<i64: 2, 256>}]} {
    %c0_i32 = arith.constant 0 : i32
    %0 = arith.cmpi eq, %arg1, %c0_i32 : i32
    %1 = arith.extui %0 : i1 to i32
    %c0_i32_0 = arith.constant 0 : i32
    %2 = arith.cmpi ne, %1, %c0_i32_0 : i32
    scf.if %2 {
      %c0_12 = arith.constant 0 : index
      %c0_13 = arith.constant 0 : index
      %c0_14 = arith.constant 0 : index
      %16 = vector.load %arg4[%c0_12, %c0_13, %c0_14] : memref<2x4x256xf32, #tpu.memory_space<vmem>>, vector<2x4x256xf32>
      %cst_15 = arith.constant dense<0.000000e+00> : vector<2x256xf32>
      %17 = vector.multi_reduction <add>, %16, %cst_15 [1] : vector<2x4x256xf32> to vector<2x256xf32>
      %c0_16 = arith.constant 0 : index
      %c0_17 = arith.constant 0 : index
      %18 = vector.load %arg6[%c0_16, %c0_17] : memref<2x256xf32, #tpu.memory_space<vmem>>, vector<2x256xf32>
      tpu.vector_store %arg6[%c0_16, %c0_17], %17 {strides = array<i32>} : memref<2x256xf32, #tpu.memory_space<vmem>>, vector<2x256xf32>,
      %cst_18 = arith.constant dense<0xFF800000> : vector<2x256xf32>
      %19 = vector.multi_reduction <maximumf>, %16, %cst_18 [1] : vector<2x4x256xf32> to vector<2x256xf32>
      %c0_19 = arith.constant 0 : index
      %c0_20 = arith.constant 0 : index
      %20 = vector.load %arg7[%c0_19, %c0_20] : memref<2x256xf32, #tpu.memory_space<vmem>>, vector<2x256xf32>
      tpu.vector_store %arg7[%c0_19, %c0_20], %19 {strides = array<i32>} : memref<2x256xf32, #tpu.memory_space<vmem>>, vector<2x256xf32>,
    } else {
    }
    %c0 = arith.constant 0 : index
    %c0_1 = arith.constant 0 : index
    %3 = vector.load %arg6[%c0, %c0_1] : memref<2x256xf32, #tpu.memory_space<vmem>>, vector<2x256xf32>
    %c0_2 = arith.constant 0 : index
    %c0_3 = arith.constant 0 : index
    %4 = vector.load %arg2[%c0_2, %c0_3] : memref<256x256xf32, #tpu.memory_space<vmem>>, vector<256x256xf32>
    %cst = arith.constant dense<0.000000e+00> : vector<2x256xf32>
    %5 = tpu.matmul %3, %4, %cst {dimension_numbers = #tpu.dot_dimension_numbers<[1], [0], [0], [1], [0, 0, 1, 1], [], []>} : vector<2x256xf32>, vector<256x256xf32>, vector<2x256xf32> -> vector<2x256xf32>
    %c0_4 = arith.constant 0 : index
    %c0_5 = arith.constant 0 : index
    %6 = vector.load %arg7[%c0_4, %c0_5] : memref<2x256xf32, #tpu.memory_space<vmem>>, vector<2x256xf32>
    %c0_6 = arith.constant 0 : index
    %c0_7 = arith.constant 0 : index
    %7 = vector.load %arg3[%c0_6, %c0_7] : memref<256x256xf32, #tpu.memory_space<vmem>>, vector<256x256xf32>
    %cst_8 = arith.constant dense<0.000000e+00> : vector<2x256xf32>
    %8 = tpu.matmul %6, %7, %cst_8 {dimension_numbers = #tpu.dot_dimension_numbers<[1], [0], [0], [1], [0, 0, 1, 1], [], []>} : vector<2x256xf32>, vector<256x256xf32>, vector<2x256xf32> -> vector<2x256xf32>
    %9 = arith.addf %5, %8 : vector<2x256xf32>
    %10 = arith.negf %9 : vector<2x256xf32>
    %11 = math.exp %10 : vector<2x256xf32>
    %cst_9 = arith.constant 1.000000e+00 : f32
    %12 = vector.broadcast %cst_9 : f32 to vector<2x256xf32>
    %13 = arith.addf %12, %11 : vector<2x256xf32>
    %14 = arith.divf %12, %13 : vector<2x256xf32>
    %c0_10 = arith.constant 0 : index
    %c0_11 = arith.constant 0 : index
    %15 = vector.load %arg5[%c0_10, %c0_11] : memref<2x256xf32, #tpu.memory_space<vmem>>, vector<2x256xf32>
    tpu.vector_store %arg5[%c0_10, %c0_11], %14 {strides = array<i32>} : memref<2x256xf32, #tpu.memory_space<vmem>>, vector<2x256xf32>,
    return
  }
  func.func @transform_0(%arg0: i32, %arg1: i32) -> (i32, i32) {
    %c0_i32 = arith.constant 0 : i32
    %c0_i32_0 = arith.constant 0 : i32
    return %c0_i32, %arg1 : i32, i32
  }
  func.func @transform_1(%arg0: i32, %arg1: i32) -> (i32, i32) {
    %c0_i32 = arith.constant 0 : i32
    %c0_i32_0 = arith.constant 0 : i32
    return %c0_i32, %arg1 : i32, i32
  }
  func.func @transform_2(%arg0: i32, %arg1: i32) -> (i32, i32, i32) {
    %c0_i32 = arith.constant 0 : i32
    %c0_i32_0 = arith.constant 0 : i32
    %c0_i32_1 = arith.constant 0 : i32
    return %arg0, %c0_i32, %c0_i32_0 : i32, i32, i32
  }
  func.func @transform_3(%arg0: i32, %arg1: i32) -> (i32, i32) {
    %c0_i32 = arith.constant 0 : i32
    return %arg0, %arg1 : i32, i32
  }
}

</mosaic_0001>

<llo_original>
// kernel: spatial_attention.1
$region0: #{spatial_attention.1}
  #allocation0 [shape = 'u32[]', space=smem, size = 0x4, offset = 0x4, fixed_abs, tag = 'smem constant byte address 0x4 - core index']
  #allocation1 [shape = 'u32[72,128]{1,0:T(1,128)}', space=vmem, size = 0x9000, scoped, tag = 'internal scratch']
  #allocation2 [shape = 'f32[2,256]{1,0:T(2,128)}', space=vmem, size = 0x800, scoped, tag = 'scratch operand']
  #allocation3 [shape = 'f32[2,256]{1,0:T(2,128)}', space=vmem, size = 0x800, scoped, tag = 'scratch operand']
  %s0 = inlined_call_operand.vmem [shape: f32[256,256], index: 0, kind: input, shape index: {}]
  %s1 = inlined_call_operand.vmem [shape: f32[256,256], index: 1, kind: input, shape index: {}]
  %s2 = inlined_call_operand.vmem [shape: f32[2,4,256], index: 2, kind: input, shape index: {}]
  %s3 = inlined_call_operand.vmem [shape: f32[2,256], index: 3, kind: output, shape index: {}]
  %s4 = sld [smem:[#allocation0]]
  $region26: #{spatial_attention.1} parent=0
    _
  %s6 = ssub.s32 1, %s4
  %s7 = scalar_select 0, %s6, %s4
  // Predicated region
  $region2: #{spatial_attention.1} parent=0 // pred_check
    _
  $region3: #{spatial_attention.1} parent=0 // pred_check_branch
    %9 = sbr.rel (0) target = $region5
  $region4: #{spatial_attention.1} parent=0 // pred_region
    _
  $region5: #{spatial_attention.1} parent=0 // pred_fallthru
    _
  // Predicated region
  $region6: #{spatial_attention.1} parent=0 // pred_check
    _
  $region7: #{spatial_attention.1} parent=0 // pred_check_branch
    %11 = sbr.rel (0) target = $region9
  $region8: #{spatial_attention.1} parent=0 // pred_region
    _
  $region9: #{spatial_attention.1} parent=0 // pred_fallthru
    _
  // Predicated region
  $region10: #{spatial_attention.1} parent=0 // pred_check
    _
  $region11: #{spatial_attention.1} parent=0 // pred_check_branch
    %13 = sbr.rel (0) target = $region13
  $region12: #{spatial_attention.1} parent=0 // pred_region
    _
  $region13: #{spatial_attention.1} parent=0 // pred_fallthru
    _
  %p14 = scmp.eq.s32.totalorder 0, 0
  // Predicated region
  $region14: #{spatial_attention.1} parent=0 // pred_check
    %p15 = pneg %p14
  $region15: #{spatial_attention.1} parent=0 // pred_check_branch
    %17 = sbr.rel (%p15) target = $region17
  $region16: #{spatial_attention.1} parent=0 // pred_region
    %v18 = vld [vmem:[%s2] sm:$0xff]
    %v19 = vld [vmem:[%s2 + $0x8] sm:$0xff]
    %22 = vst [vmem:[#allocation1] ss:$2 sm:$0xff] %v18
    %v23 = vld.sshfl [vmem:[#allocation1] sm:$0xff pattern:$0x75316420]
    %v24 = vld.sshfl [vmem:[#allocation1 + $0x8] sm:$0xff pattern:$0x75316420]
    %s25 = scalar_lea.vmem [#allocation1], 16
    %26 = vst [vmem:[%s25] ss:$2 sm:$0xff] %v19
    %v27 = vld.sshfl [vmem:[#allocation1 + $0x10] sm:$0xff pattern:$0x75316420]
    %v28 = vld.sshfl [vmem:[#allocation1 + $0x18] sm:$0xff pattern:$0x75316420]
    %vm33 = vcmask 1043456
    %v34 = vsel %vm33, %v23, 0.0
    %v35 = vrot.slane %v34, 4
    %v36 = vadd.f32 %v34, %v35
    %v37 = vrot.slane %v36, 2
    %v38 = vadd.f32 %v36, %v37
    %v39 = vrot.slane %v38, 1
    %v40 = vadd.f32 %v38, %v39
    %v41 = vsel %vm33, %v24, 0.0
    %v42 = vrot.slane %v41, 4
    %v43 = vadd.f32 %v41, %v42
    %v44 = vrot.slane %v43, 2
    %v45 = vadd.f32 %v43, %v44
    %v46 = vrot.slane %v45, 1
    %v47 = vadd.f32 %v45, %v46
    %v48 = vsel %vm33, %v27, 0.0
    %v49 = vrot.slane %v48, 4
    %v50 = vadd.f32 %v48, %v49
    %v51 = vrot.slane %v50, 2
    %v52 = vadd.f32 %v50, %v51
    %v53 = vrot.slane %v52, 1
    %v54 = vadd.f32 %v52, %v53
    %v55 = vsel %vm33, %v28, 0.0
    %v56 = vrot.slane %v55, 4
    %v57 = vadd.f32 %v55, %v56
    %v58 = vrot.slane %v57, 2
    %v59 = vadd.f32 %v57, %v58
    %v60 = vrot.slane %v59, 1
    %v61 = vadd.f32 %v59, %v60
    %v66 = vrot.slane %v47, 6
    %v67 = vrot.slane %v61, 6
    %vm68 = vcmask 1041408
    %v69 = vsel %vm68, %v40, %v66
    %v70 = vsel %vm68, %v54, %v67
    %vm71 = vcmask 1044484
    %v72 = vsel %vm71, %v69, %v69
    %vm73 = vcmask 1046534
    %v74 = vsel %vm73, %v69, %v72
    %v75 = vrot.slane %v70, 7
    %vm76 = vcmask 1041409
    %v77 = vsel %vm76, %v75, %v74
    %vm78 = vcmask 1043459
    %v79 = vsel %vm78, %v75, %v77
    %vm80 = vcmask 1045509
    %v81 = vsel %vm80, %v75, %v79
    %vm82 = vcmask 1047559
    %v83 = vsel %vm82, %v75, %v81
    %85 = vst [vmem:[#allocation2] sm:$0xf] %v83
    %86 = vst [vmem:[#allocation1] ss:$2 sm:$0xff] %v18
    %v87 = vld.sshfl [vmem:[#allocation1] sm:$0xff pattern:$0x75316420]
    %v88 = vld.sshfl [vmem:[#allocation1 + $0x8] sm:$0xff pattern:$0x75316420]
    %s89 = scalar_lea.vmem [#allocation1], 16
    %90 = vst [vmem:[%s89] ss:$2 sm:$0xff] %v19
    %v91 = vld.sshfl [vmem:[#allocation1 + $0x10] sm:$0xff pattern:$0x75316420]
    %v92 = vld.sshfl [vmem:[#allocation1 + $0x18] sm:$0xff pattern:$0x75316420]
    %v97 = vsel %vm33, %v87, -inf
    %v98 = vrot.slane %v97, 4
    %v99 = vmax.f32 %v97, %v98
    %v100 = vrot.slane %v99, 2
    %v101 = vmax.f32 %v99, %v100
    %v102 = vrot.slane %v101, 1
    %v103 = vmax.f32 %v101, %v102
    %v104 = vsel %vm33, %v88, -inf
    %v105 = vrot.slane %v104, 4
    %v106 = vmax.f32 %v104, %v105
    %v107 = vrot.slane %v106, 2
    %v108 = vmax.f32 %v106, %v107
    %v109 = vrot.slane %v108, 1
    %v110 = vmax.f32 %v108, %v109
    %v111 = vsel %vm33, %v91, -inf
    %v112 = vrot.slane %v111, 4
    %v113 = vmax.f32 %v111, %v112
    %v114 = vrot.slane %v113, 2
    %v115 = vmax.f32 %v113, %v114
    %v116 = vrot.slane %v115, 1
    %v117 = vmax.f32 %v115, %v116
    %v118 = vsel %vm33, %v92, -inf
    %v119 = vrot.slane %v118, 4
    %v120 = vmax.f32 %v118, %v119
    %v121 = vrot.slane %v120, 2
    %v122 = vmax.f32 %v120, %v121
    %v123 = vrot.slane %v122, 1
    %v124 = vmax.f32 %v122, %v123
    %v129 = vrot.slane %v110, 6
    %v130 = vrot.slane %v124, 6
    %v131 = vsel %vm68, %v103, %v129
    %v132 = vsel %vm68, %v117, %v130
    %v133 = vsel %vm71, %v131, %v131
    %v134 = vsel %vm73, %v131, %v133
    %v135 = vrot.slane %v132, 7
    %v136 = vsel %vm76, %v135, %v134
    %v137 = vsel %vm78, %v135, %v136
    %v138 = vsel %vm80, %v135, %v137
    %v139 = vsel %vm82, %v135, %v138
    %141 = vst [vmem:[#allocation3] sm:$0xf] %v139
  $region17: #{spatial_attention.1} parent=0 // pred_fallthru
    _
  %v142 = vld [vmem:[#allocation2] sm:$0xf]
  %v143 = vld [vmem:[%s0] sm:$0xff]
  %v144 = vld [vmem:[%s0 + $0x8] sm:$0xff]
  %v145 = vld [vmem:[%s0 + $0x10] sm:$0xff]
  %v146 = vld [vmem:[%s0 + $0x18] sm:$0xff]
  %v147 = vld [vmem:[%s0 + $0x20] sm:$0xff]
  %v148 = vld [vmem:[%s0 + $0x28] sm:$0xff]
  %v149 = vld [vmem:[%s0 + $0x30] sm:$0xff]
  %v150 = vld [vmem:[%s0 + $0x38] sm:$0xff]
  %v151 = vld [vmem:[%s0 + $0x40] sm:$0xff]
  %v152 = vld [vmem:[%s0 + $0x48] sm:$0xff]
  %v153 = vld [vmem:[%s0 + $0x50] sm:$0xff]
  %v154 = vld [vmem:[%s0 + $0x58] sm:$0xff]
  %v155 = vld [vmem:[%s0 + $0x60] sm:$0xff]
  %v156 = vld [vmem:[%s0 + $0x68] sm:$0xff]
  %v157 = vld [vmem:[%s0 + $0x70] sm:$0xff]
  %v158 = vld [vmem:[%s0 + $0x78] sm:$0xff]
  %v159 = vld [vmem:[%s0 + $0x80] sm:$0xff]
  %v160 = vld [vmem:[%s0 + $0x88] sm:$0xff]
  %v161 = vld [vmem:[%s0 + $0x90] sm:$0xff]
  %v162 = vld [vmem:[%s0 + $0x98] sm:$0xff]
  %v163 = vld [vmem:[%s0 + $0xa0] sm:$0xff]
  %v164 = vld [vmem:[%s0 + $0xa8] sm:$0xff]
  %v165 = vld [vmem:[%s0 + $0xb0] sm:$0xff]
  %v166 = vld [vmem:[%s0 + $0xb8] sm:$0xff]
  %v167 = vld [vmem:[%s0 + $0xc0] sm:$0xff]
  %v168 = vld [vmem:[%s0 + $0xc8] sm:$0xff]
  %v169 = vld [vmem:[%s0 + $0xd0] sm:$0xff]
  %v170 = vld [vmem:[%s0 + $0xd8] sm:$0xff]
  %v171 = vld [vmem:[%s0 + $0xe0] sm:$0xff]
  %v172 = vld [vmem:[%s0 + $0xe8] sm:$0xff]
  %v173 = vld [vmem:[%s0 + $0xf0] sm:$0xff]
  %v174 = vld [vmem:[%s0 + $0xf8] sm:$0xff]
  %v175 = vld [vmem:[%s0 + $0x100] sm:$0xff]
  %v176 = vld [vmem:[%s0 + $0x108] sm:$0xff]
  %v177 = vld [vmem:[%s0 + $0x110] sm:$0xff]
  %v178 = vld [vmem:[%s0 + $0x118] sm:$0xff]
  %v179 = vld [vmem:[%s0 + $0x120] sm:$0xff]
  %v180 = vld [vmem:[%s0 + $0x128] sm:$0xff]
  %v181 = vld [vmem:[%s0 + $0x130] sm:$0xff]
  %v182 = vld [vmem:[%s0 + $0x138] sm:$0xff]
  %v183 = vld [vmem:[%s0 + $0x140] sm:$0xff]
  %v184 = vld [vmem:[%s0 + $0x148] sm:$0xff]
  %v185 = vld [vmem:[%s0 + $0x150] sm:$0xff]
  %v186 = vld [vmem:[%s0 + $0x158] sm:$0xff]
  %v187 = vld [vmem:[%s0 + $0x160] sm:$0xff]
  %v188 = vld [vmem:[%s0 + $0x168] sm:$0xff]
  %v189 = vld [vmem:[%s0 + $0x170] sm:$0xff]
  %v190 = vld [vmem:[%s0 + $0x178] sm:$0xff]
  %v191 = vld [vmem:[%s0 + $0x180] sm:$0xff]
  %v192 = vld [vmem:[%s0 + $0x188] sm:$0xff]
  %v193 = vld [vmem:[%s0 + $0x190] sm:$0xff]
  %v194 = vld [vmem:[%s0 + $0x198] sm:$0xff]
  %v195 = vld [vmem:[%s0 + $0x1a0] sm:$0xff]
  %v196 = vld [vmem:[%s0 + $0x1a8] sm:$0xff]
  %v197 = vld [vmem:[%s0 + $0x1b0] sm:$0xff]
  %v198 = vld [vmem:[%s0 + $0x1b8] sm:$0xff]
  %v199 = vld [vmem:[%s0 + $0x1c0] sm:$0xff]
  %v200 = vld [vmem:[%s0 + $0x1c8] sm:$0xff]
  %v201 = vld [vmem:[%s0 + $0x1d0] sm:$0xff]
  %v202 = vld [vmem:[%s0 + $0x1d8] sm:$0xff]
  %v203 = vld [vmem:[%s0 + $0x1e0] sm:$0xff]
  %v204 = vld [vmem:[%s0 + $0x1e8] sm:$0xff]
  %v205 = vld [vmem:[%s0 + $0x1f0] sm:$0xff]
  %v206 = vld [vmem:[%s0 + $0x1f8] sm:$0xff]
  %v207 = vld [vmem:[#allocation3] sm:$0xf]
  %v208 = vld [vmem:[%s1] sm:$0xff]
  %v209 = vld [vmem:[%s1 + $0x8] sm:$0xff]
  %v210 = vld [vmem:[%s1 + $0x10] sm:$0xff]
  %v211 = vld [vmem:[%s1 + $0x18] sm:$0xff]
  %v212 = vld [vmem:[%s1 + $0x20] sm:$0xff]
  %v213 = vld [vmem:[%s1 + $0x28] sm:$0xff]
  %v214 = vld [vmem:[%s1 + $0x30] sm:$0xff]
  %v215 = vld [vmem:[%s1 + $0x38] sm:$0xff]
  %v216 = vld [vmem:[%s1 + $0x40] sm:$0xff]
  %v217 = vld [vmem:[%s1 + $0x48] sm:$0xff]
  %v218 = vld [vmem:[%s1 + $0x50] sm:$0xff]
  %v219 = vld [vmem:[%s1 + $0x58] sm:$0xff]
  %v220 = vld [vmem:[%s1 + $0x60] sm:$0xff]
  %v221 = vld [vmem:[%s1 + $0x68] sm:$0xff]
  %v222 = vld [vmem:[%s1 + $0x70] sm:$0xff]
  %v223 = vld [vmem:[%s1 + $0x78] sm:$0xff]
  %v224 = vld [vmem:[%s1 + $0x80] sm:$0xff]
  %v225 = vld [vmem:[%s1 + $0x88] sm:$0xff]
  %v226 = vld [vmem:[%s1 + $0x90] sm:$0xff]
  %v227 = vld [vmem:[%s1 + $0x98] sm:$0xff]
  %v228 = vld [vmem:[%s1 + $0xa0] sm:$0xff]
  %v229 = vld [vmem:[%s1 + $0xa8] sm:$0xff]
  %v230 = vld [vmem:[%s1 + $0xb0] sm:$0xff]
  %v231 = vld [vmem:[%s1 + $0xb8] sm:$0xff]
  %v232 = vld [vmem:[%s1 + $0xc0] sm:$0xff]
  %v233 = vld [vmem:[%s1 + $0xc8] sm:$0xff]
  %v234 = vld [vmem:[%s1 + $0xd0] sm:$0xff]
  %v235 = vld [vmem:[%s1 + $0xd8] sm:$0xff]
  %v236 = vld [vmem:[%s1 + $0xe0] sm:$0xff]
  %v237 = vld [vmem:[%s1 + $0xe8] sm:$0xff]
  %v238 = vld [vmem:[%s1 + $0xf0] sm:$0xff]
  %v239 = vld [vmem:[%s1 + $0xf8] sm:$0xff]
  %v240 = vld [vmem:[%s1 + $0x100] sm:$0xff]
  %v241 = vld [vmem:[%s1 + $0x108] sm:$0xff]
  %v242 = vld [vmem:[%s1 + $0x110] sm:$0xff]
  %v243 = vld [vmem:[%s1 + $0x118] sm:$0xff]
  %v244 = vld [vmem:[%s1 + $0x120] sm:$0xff]
  %v245 = vld [vmem:[%s1 + $0x128] sm:$0xff]
  %v246 = vld [vmem:[%s1 + $0x130] sm:$0xff]
  %v247 = vld [vmem:[%s1 + $0x138] sm:$0xff]
  %v248 = vld [vmem:[%s1 + $0x140] sm:$0xff]
  %v249 = vld [vmem:[%s1 + $0x148] sm:$0xff]
  %v250 = vld [vmem:[%s1 + $0x150] sm:$0xff]
  %v251 = vld [vmem:[%s1 + $0x158] sm:$0xff]
  %v252 = vld [vmem:[%s1 + $0x160] sm:$0xff]
  %v253 = vld [vmem:[%s1 + $0x168] sm:$0xff]
  %v254 = vld [vmem:[%s1 + $0x170] sm:$0xff]
  %v255 = vld [vmem:[%s1 + $0x178] sm:$0xff]
  %v256 = vld [vmem:[%s1 + $0x180] sm:$0xff]
  %v257 = vld [vmem:[%s1 + $0x188] sm:$0xff]
  %v258 = vld [vmem:[%s1 + $0x190] sm:$0xff]
  %v259 = vld [vmem:[%s1 + $0x198] sm:$0xff]
  %v260 = vld [vmem:[%s1 + $0x1a0] sm:$0xff]
  %v261 = vld [vmem:[%s1 + $0x1a8] sm:$0xff]
  %v262 = vld [vmem:[%s1 + $0x1b0] sm:$0xff]
  %v263 = vld [vmem:[%s1 + $0x1b8] sm:$0xff]
  %v264 = vld [vmem:[%s1 + $0x1c0] sm:$0xff]
  %v265 = vld [vmem:[%s1 + $0x1c8] sm:$0xff]
  %v266 = vld [vmem:[%s1 + $0x1d0] sm:$0xff]
  %v267 = vld [vmem:[%s1 + $0x1d8] sm:$0xff]
  %v268 = vld [vmem:[%s1 + $0x1e0] sm:$0xff]
  %v269 = vld [vmem:[%s1 + $0x1e8] sm:$0xff]
  %v270 = vld [vmem:[%s1 + $0x1f0] sm:$0xff]
  %v271 = vld [vmem:[%s1 + $0x1f8] sm:$0xff]
  %273 = vst [vmem:[#allocation1] ss:$4 sm:$0xff] %v207
  %v274 = vld.sshfl [vmem:[#allocation1] sm:$0xff pattern:$0x73625140]
  %v275 = vld.sshfl [vmem:[#allocation1 + $0x8] sm:$0xff pattern:$0x73625140]
  %278 = vmatpush.msra.mxu0 %v238
  %279 = vmatpush.msra.mxu0 %v236
  %280 = vmatpush.msra.mxu0 %v234
  %281 = vmatpush.msra.mxu0 %v232
  %282 = vmatpush.msra.mxu0 %v230
  %283 = vmatpush.msra.mxu0 %v228
  %284 = vmatpush.msra.mxu0 %v226
  %285 = vmatpush.msra.mxu0 %v224
  %286 = vmatpush.msra.mxu0 %v222
  %287 = vmatpush.msra.mxu0 %v220
  %288 = vmatpush.msra.mxu0 %v218
  %289 = vmatpush.msra.mxu0 %v216
  %290 = vmatpush.msra.mxu0 %v214
  %291 = vmatpush.msra.mxu0 %v212
  %292 = vmatpush.msra.mxu0 %v210
  %293 = vmatpush.msra.mxu0 %v208
  %294 = vmatmul.f32.gmra.mxu0 %v274
  %v295 = vpop.f32.mrf.mxu0
  %v296 = vadd.f32 0.0, %v295
  %297 = vdwg.mxu0
  %298 = vmatpush.msra.mxu0 %v270
  %299 = vmatpush.msra.mxu0 %v268
  %300 = vmatpush.msra.mxu0 %v266
  %301 = vmatpush.msra.mxu0 %v264
  %302 = vmatpush.msra.mxu0 %v262
  %303 = vmatpush.msra.mxu0 %v260
  %304 = vmatpush.msra.mxu0 %v258
  %305 = vmatpush.msra.mxu0 %v256
  %306 = vmatpush.msra.mxu0 %v254
  %307 = vmatpush.msra.mxu0 %v252
  %308 = vmatpush.msra.mxu0 %v250
  %309 = vmatpush.msra.mxu0 %v248
  %310 = vmatpush.msra.mxu0 %v246
  %311 = vmatpush.msra.mxu0 %v244
  %312 = vmatpush.msra.mxu0 %v242
  %313 = vmatpush.msra.mxu0 %v240
  %314 = vmatmul.f32.gmra.mxu0 %v275
  %v315 = vpop.f32.mrf.mxu0
  %v316 = vadd.f32 %v296, %v315
  %317 = vdwg.mxu0
  %318 = vmatpush.msra.mxu0 %v239
  %319 = vmatpush.msra.mxu0 %v237
  %320 = vmatpush.msra.mxu0 %v235
  %321 = vmatpush.msra.mxu0 %v233
  %322 = vmatpush.msra.mxu0 %v231
  %323 = vmatpush.msra.mxu0 %v229
  %324 = vmatpush.msra.mxu0 %v227
  %325 = vmatpush.msra.mxu0 %v225
  %326 = vmatpush.msra.mxu0 %v223
  %327 = vmatpush.msra.mxu0 %v221
  %328 = vmatpush.msra.mxu0 %v219
  %329 = vmatpush.msra.mxu0 %v217
  %330 = vmatpush.msra.mxu0 %v215
  %331 = vmatpush.msra.mxu0 %v213
  %332 = vmatpush.msra.mxu0 %v211
  %333 = vmatpush.msra.mxu0 %v209
  %334 = vmatmul.f32.gmra.mxu0 %v274
  %v335 = vpop.f32.mrf.mxu0
  %v336 = vadd.f32 0.0, %v335
  %337 = vdwg.mxu0
  %338 = vmatpush.msra.mxu0 %v271
  %339 = vmatpush.msra.mxu0 %v269
  %340 = vmatpush.msra.mxu0 %v267
  %341 = vmatpush.msra.mxu0 %v265
  %342 = vmatpush.msra.mxu0 %v263
  %343 = vmatpush.msra.mxu0 %v261
  %344 = vmatpush.msra.mxu0 %v259
  %345 = vmatpush.msra.mxu0 %v257
  %346 = vmatpush.msra.mxu0 %v255
  %347 = vmatpush.msra.mxu0 %v253
  %348 = vmatpush.msra.mxu0 %v251
  %349 = vmatpush.msra.mxu0 %v249
  %350 = vmatpush.msra.mxu0 %v247
  %351 = vmatpush.msra.mxu0 %v245
  %352 = vmatpush.msra.mxu0 %v243
  %353 = vmatpush.msra.mxu0 %v241
  %354 = vmatmul.f32.gmra.mxu0 %v275
  %v355 = vpop.f32.mrf.mxu0
  %v356 = vadd.f32 %v336, %v355
  %357 = vdwg.mxu0
  %359 = vst [vmem:[#allocation1] ss:$4 sm:$0xff] %v142
  %v360 = vld.sshfl [vmem:[#allocation1] sm:$0xff pattern:$0x73625140]
  %v361 = vld.sshfl [vmem:[#allocation1 + $0x8] sm:$0xff pattern:$0x73625140]
  %364 = vmatpush.msra.mxu0 %v173
  %365 = vmatpush.msra.mxu0 %v171
  %366 = vmatpush.msra.mxu0 %v169
  %367 = vmatpush.msra.mxu0 %v167
  %368 = vmatpush.msra.mxu0 %v165
  %369 = vmatpush.msra.mxu0 %v163
  %370 = vmatpush.msra.mxu0 %v161
  %371 = vmatpush.msra.mxu0 %v159
  %372 = vmatpush.msra.mxu0 %v157
  %373 = vmatpush.msra.mxu0 %v155
  %374 = vmatpush.msra.mxu0 %v153
  %375 = vmatpush.msra.mxu0 %v151
  %376 = vmatpush.msra.mxu0 %v149
  %377 = vmatpush.msra.mxu0 %v147
  %378 = vmatpush.msra.mxu0 %v145
  %379 = vmatpush.msra.mxu0 %v143
  %380 = vmatmul.f32.gmra.mxu0 %v360
  %v381 = vpop.f32.mrf.mxu0
  %v382 = vadd.f32 %v316, %v381
  %383 = vdwg.mxu0
  %384 = vmatpush.msra.mxu0 %v205
  %385 = vmatpush.msra.mxu0 %v203
  %386 = vmatpush.msra.mxu0 %v201
  %387 = vmatpush.msra.mxu0 %v199
  %388 = vmatpush.msra.mxu0 %v197
  %389 = vmatpush.msra.mxu0 %v195
  %390 = vmatpush.msra.mxu0 %v193
  %391 = vmatpush.msra.mxu0 %v191
  %392 = vmatpush.msra.mxu0 %v189
  %393 = vmatpush.msra.mxu0 %v187
  %394 = vmatpush.msra.mxu0 %v185
  %395 = vmatpush.msra.mxu0 %v183
  %396 = vmatpush.msra.mxu0 %v181
  %397 = vmatpush.msra.mxu0 %v179
  %398 = vmatpush.msra.mxu0 %v177
  %399 = vmatpush.msra.mxu0 %v175
  %400 = vmatmul.f32.gmra.mxu0 %v361
  %v401 = vpop.f32.mrf.mxu0
  %v402 = vadd.f32 %v382, %v401
  %403 = vdwg.mxu0
  %404 = vmatpush.msra.mxu0 %v174
  %405 = vmatpush.msra.mxu0 %v172
  %406 = vmatpush.msra.mxu0 %v170
  %407 = vmatpush.msra.mxu0 %v168
  %408 = vmatpush.msra.mxu0 %v166
  %409 = vmatpush.msra.mxu0 %v164
  %410 = vmatpush.msra.mxu0 %v162
  %411 = vmatpush.msra.mxu0 %v160
  %412 = vmatpush.msra.mxu0 %v158
  %413 = vmatpush.msra.mxu0 %v156
  %414 = vmatpush.msra.mxu0 %v154
  %415 = vmatpush.msra.mxu0 %v152
  %416 = vmatpush.msra.mxu0 %v150
  %417 = vmatpush.msra.mxu0 %v148
  %418 = vmatpush.msra.mxu0 %v146
  %419 = vmatpush.msra.mxu0 %v144
  %420 = vmatmul.f32.gmra.mxu0 %v360
  %v421 = vpop.f32.mrf.mxu0
  %v422 = vadd.f32 %v356, %v421
  %423 = vdwg.mxu0
  %424 = vmatpush.msra.mxu0 %v206
  %425 = vmatpush.msra.mxu0 %v204
  %426 = vmatpush.msra.mxu0 %v202
  %427 = vmatpush.msra.mxu0 %v200
  %428 = vmatpush.msra.mxu0 %v198
  %429 = vmatpush.msra.mxu0 %v196
  %430 = vmatpush.msra.mxu0 %v194
  %431 = vmatpush.msra.mxu0 %v192
  %432 = vmatpush.msra.mxu0 %v190
  %433 = vmatpush.msra.mxu0 %v188
  %434 = vmatpush.msra.mxu0 %v186
  %435 = vmatpush.msra.mxu0 %v184
  %436 = vmatpush.msra.mxu0 %v182
  %437 = vmatpush.msra.mxu0 %v180
  %438 = vmatpush.msra.mxu0 %v178
  %439 = vmatpush.msra.mxu0 %v176
  %440 = vmatmul.f32.gmra.mxu0 %v361
  %v441 = vpop.f32.mrf.mxu0
  %v442 = vadd.f32 %v422, %v441
  %443 = vdwg.mxu0
  %v444 = vxor.u32 %v402, 2147483648
  %v445 = vxor.u32 %v442, 2147483648
  %v446 = vmul.f32 %v444, 1.442695
  %v447 = vpow.pop %v446
  %v448 = vmul.f32 %v445, 1.442695
  %v449 = vpow.pop %v448
  %v450 = vadd.f32 %v447, 1.0
  %v451 = vadd.f32 %v449, 1.0
  %v452 = vrcp.pop %v450
  %v453 = vmul.f32 %v450, %v452
  %v454 = vsub.f32 1.0, %v453
  %v455 = vmul.f32 %v452, %v454
  %v456 = vadd.f32 %v452, %v455
  %vm457 = vweird.f32 %v450
  %vm458 = vweird.f32 %v452
  %vm459 = vmor %vm457, %vm458
  %v460 = vsel %vm459, %v452, %v456
  %v461 = vand.u32 2147483647, %v450
  %vm462 = vcmp.eq.f32.partialorder %v461, 8.507059e+37
  %v463 = vand.u32 %v450, 2147483648
  %v464 = vor.u32 1.1754944e-38, %v463
  %v465 = vsel %vm462, %v464, %v460
  %v466 = vmul.f32 1.0, %v465
  %v467 = vrcp.pop %v451
  %v468 = vmul.f32 %v451, %v467
  %v469 = vsub.f32 1.0, %v468
  %v470 = vmul.f32 %v467, %v469
  %v471 = vadd.f32 %v467, %v470
  %vm472 = vweird.f32 %v451
  %vm473 = vweird.f32 %v467
  %vm474 = vmor %vm472, %vm473
  %v475 = vsel %vm474, %v467, %v471
  %v476 = vand.u32 2147483647, %v451
  %vm477 = vcmp.eq.f32.partialorder %v476, 8.507059e+37
  %v478 = vand.u32 %v451, 2147483648
  %v479 = vor.u32 1.1754944e-38, %v478
  %v480 = vsel %vm477, %v479, %v475
  %v481 = vmul.f32 1.0, %v480
  %v484 = vrot.slane %v481, 6
  %vm485 = vcmask 1041408
  %v486 = vsel %vm485, %v466, %v484
  %488 = vst [vmem:[%s3] sm:$0xf] %v486
  // Predicated region
  $region18: #{spatial_attention.1} parent=0 // pred_check
    _
  $region19: #{spatial_attention.1} parent=0 // pred_check_branch
    %490 = sbr.rel (0) target = $region21
  $region20: #{spatial_attention.1} parent=0 // pred_region
    _
  $region21: #{spatial_attention.1} parent=0 // pred_fallthru
    _
  // Predicated region
  $region22: #{spatial_attention.1} parent=0 // pred_check
    _
  $region23: #{spatial_attention.1} parent=0 // pred_check_branch
    %492 = sbr.rel (0) target = $region25
  $region24: #{spatial_attention.1} parent=0 // pred_region
    _
  $region25: #{spatial_attention.1} parent=0 // pred_fallthru
    _

</llo_original>
